<compile_context>
chip_gen: v5e
topology: v5e:2x2
jax: 0.10.0
libtpu: 0.0.40
codegen_flags: <defaults>
</compile_context>

<pallas_src>
import math

import jax
import jax.numpy as jnp
from jax.experimental import pallas as pl
from jax.experimental.pallas import tpu as pltpu

_P = 128  # lane-padded width for every hidden layer


def _pattern_kernel(x_ref, w_ref, b_ref, o_ref):
    f32 = jnp.float32
    k3 = x_ref.shape[1]                       # static: 3*k
    x = x_ref[...]                            # (TM, 3k)
    b = b_ref[...]                            # (8, P): rows 0..4 hold the biases
    w0 = w_ref[0]                             # (P, P); only rows < 3k are nonzero
    # Conv2d(1->6,(3,1)) as a structured matmul + ReLU              -> (TM, P)
    h = jnp.maximum(
        jnp.dot(x, w0[:k3, :], preferred_element_type=f32) + b[0:1, :], 0.0)
    # LL1 + ReLU
    h = jnp.maximum(
        jnp.dot(h, w_ref[1], preferred_element_type=f32) + b[1:2, :], 0.0)
    # LL2 + ReLU
    h = jnp.maximum(
        jnp.dot(h, w_ref[2], preferred_element_type=f32) + b[2:3, :], 0.0)
    # LL3 + ReLU
    h = jnp.maximum(
        jnp.dot(h, w_ref[3], preferred_element_type=f32) + b[3:4, :], 0.0)
    # OutputLayer (no activation; the module's LogSoftmax is unused in forward)
    o_ref[...] = jnp.dot(h, w_ref[4], preferred_element_type=f32) + b[4:5, :]


def pack_params(params, k):
    """Build the (5, P, P) weight slab and (8, P) bias slab once, at init time.

    Block 0 embeds Conv2d(1,6,(3,1)) as CW[h*k + w, oc*k + w] = conv_w[oc,0,h,0]
    (reproducing both the conv arithmetic and PyTorch's channel-major flatten);
    blocks 1..4 are the transposed Linear weights, all zero-padded to 128 lanes.
    """
    assert 6 * k <= _P, f"window k={k} too large: need 6*k <= {_P}"

    cw = params["conv_w"].reshape(6, 3)             # cw[oc, h]
    eye = jnp.eye(k, dtype=jnp.float32)
    conv_block = jnp.concatenate(
        [jnp.concatenate([cw[oc, h] * eye for oc in range(6)], axis=1)
         for h in range(3)], axis=0)                # (3k, 6k)
    CW = jnp.zeros((_P, _P), jnp.float32).at[:3 * k, :6 * k].set(conv_block)

    def pad_wT(w):                                  # torch (out, in) -> (P, P) as [in, out]
        out_f, in_f = w.shape
        return jnp.zeros((_P, _P), jnp.float32).at[:in_f, :out_f].set(w.T)

    W = jnp.stack([CW,
                   pad_wT(params["w1"]), pad_wT(params["w2"]),
                   pad_wT(params["w3"]), pad_wT(params["w4"])])          # (5, P, P)

    def pad_b(b):
        return jnp.zeros((_P,), jnp.float32).at[:b.shape[0]].set(b)

    cb = jnp.repeat(params["conv_b"], k)            # CB[oc*k + w] = conv_b[oc]
    zero = jnp.zeros((_P,), jnp.float32)
    B = jnp.stack([pad_b(cb), pad_b(params["b1"]), pad_b(params["b2"]),
                   pad_b(params["b3"]), pad_b(params["b4"]),
                   zero, zero, zero])               # (8, P)
    return W, B


def init_params(key, k):
    """Deterministic parameters mimicking PyTorch default U(-1/sqrt(fan_in), ...)."""
    def linear(kk, out_f, in_f):
        k1, k2 = jax.random.split(kk)
        bound = 1.0 / math.sqrt(in_f)
        w = jax.random.uniform(k1, (out_f, in_f), jnp.float32, -bound, bound)
        b = jax.random.uniform(k2, (out_f,), jnp.float32, -bound, bound)
        return w, b

    kc, k1, k2, k3, k4 = jax.random.split(key, 5)
    bnd = 1.0 / math.sqrt(1 * 3 * 1)                # conv fan_in = C_in*kh*kw
    kc1, kc2 = jax.random.split(kc)
    conv_w = jax.random.uniform(kc1, (6, 1, 3, 1), jnp.float32, -bnd, bnd)
    conv_b = jax.random.uniform(kc2, (6,), jnp.float32, -bnd, bnd)
    w1, b1 = linear(k1, 3 * k, 6 * k)
    w2, b2 = linear(k2, k, 3 * k)
    w3, b3 = linear(k3, 3, k)
    w4, b4 = linear(k4, 3, 3)
    return dict(conv_w=conv_w, conv_b=conv_b,
                w1=w1, b1=b1, w2=w2, b2=b2, w3=w3, b3=b3, w4=w4, b4=b4)


def pattern_network_forward(x, packed, k, *, tile_m=None):
    """x: (N, 1, 3, k) float32 (NCHW, same as the PyTorch module). Returns (N, 3)."""
    W, B = packed
    N = x.shape[0]
    assert x.shape == (N, 1, 3, k), x.shape
    x_flat = x.reshape(N, 3 * k).astype(jnp.float32)

    if tile_m is None:
        # Big row tile (multiple of 8) to amortize per-step overhead; weights are
        # tiny so even 1024x128 f32 intermediates stay far below every
        # generation's scoped-VMEM default (incl. v7x's 32 MiB).
        tile_m = min(1024, max(8, ((N + 7) // 8) * 8))
    grid = (pl.cdiv(N, tile_m),)

    out_padded = pl.pallas_call(
        _pattern_kernel,
        out_shape=jax.ShapeDtypeStruct((N, _P), jnp.float32),
        grid=grid,
        in_specs=[
            pl.BlockSpec((tile_m, 3 * k), lambda i: (i, 0)),     # x tile (pipelined)
            pl.BlockSpec(W.shape, lambda i: (0, 0, 0)),          # weight slab (resident)
            pl.BlockSpec(B.shape, lambda i: (0, 0)),             # bias slab (resident)
        ],
        out_specs=pl.BlockSpec((tile_m, _P), lambda i: (i, 0)),  # lane-dense output
        compiler_params=pltpu.CompilerParams(
            dimension_semantics=("parallel",)),                  # shard N across TCs (v7x)
    )(x_flat, W, B)
    return out_padded[:, :3]


def reference_forward(x, params, k):
    """Pure-JAX reference matching the PyTorch forward exactly."""
    N = x.shape[0]
    cw = params["conv_w"].reshape(6, 3)
    # Conv2d: out[n, oc, 0, w] = sum_h cw[oc, h] * x[n, 0, h, w] + b[oc]
    l1 = jnp.einsum("oh,nhw->now", cw, x[:, 0]) + params["conv_b"][None, :, None]
    l1 = jnp.maximum(l1, 0.0).reshape(N, 6 * k)          # channel-major flatten
    l2 = jnp.maximum(l1 @ params["w1"].T + params["b1"], 0.0)
    l3 = jnp.maximum(l2 @ params["w2"].T + params["b2"], 0.0)
    l4 = jnp.maximum(l3 @ params["w3"].T + params["b3"], 0.0)
    return l4 @ params["w4"].T + params["b4"]
    # TODO(synk): self.out = nn.LogSoftmax(dim=1) is defined in __init__ but never
    # applied in forward(), so it is intentionally omitted here.


if __name__ == "__main__":
    K = 8           # window
    N = 2           # batch
    key = jax.random.PRNGKey(0)
    kx, kp = jax.random.split(key)

    x = jax.random.normal(kx, (N, 1, 3, K), dtype=jnp.float32)
    params = init_params(kp, K)
    packed = pack_params(params, K)          # hoisted out of the per-call path

    out = pattern_network_forward(x, packed, K)
    out = jax.block_until_ready(out)

    ref = reference_forward(x, params, K)
    assert out.shape == (N, 3)
    assert jnp.allclose(out, ref, rtol=1e-4, atol=1e-4), (out, ref)

    print("KERNEL_OK")
</pallas_src>

<mosaic_0001>
module attributes {stable_mosaic.version = 11 : i64} {
  func.func @_pattern_kernel(%arg0: i32, %arg1: memref<8x24xf32, #tpu.memory_space<vmem>>, %arg2: memref<5x128x128xf32, #tpu.memory_space<vmem>>, %arg3: memref<8x128xf32, #tpu.memory_space<vmem>>, %arg4: memref<8x128xf32, #tpu.memory_space<vmem>>) attributes {dimension_semantics = [#tpu.dimension_semantics<parallel>], iteration_bounds = array<i64: 1>, scalar_prefetch = 0 : i64, scratch_operands = 0 : i64, tpu.core_type = #tpu.core_type<tc>, window_params = [{transform_indices = @transform_0, window_bounds = array<i64: 8, 24>}, {pipeline_mode = #tpu.pipeline_mode<synchronous>, transform_indices = @transform_1, window_bounds = array<i64: 5, 128, 128>}, {pipeline_mode = #tpu.pipeline_mode<synchronous>, transform_indices = @transform_2, window_bounds = array<i64: 8, 128>}, {transform_indices = @transform_3, window_bounds = array<i64: 8, 128>}]} {
    %c0 = arith.constant 0 : index
    %c0_0 = arith.constant 0 : index
    %0 = vector.load %arg1[%c0, %c0_0] : memref<8x24xf32, #tpu.memory_space<vmem>>, vector<8x24xf32>
    %c0_1 = arith.constant 0 : index
    %c0_2 = arith.constant 0 : index
    %1 = vector.load %arg3[%c0_1, %c0_2] : memref<8x128xf32, #tpu.memory_space<vmem>>, vector<8x128xf32>
    %c0_3 = arith.constant 0 : index
    %c0_4 = arith.constant 0 : index
    %c0_5 = arith.constant 0 : index
    %2 = vector.load %arg2[%c0_3, %c0_4, %c0_5] : memref<5x128x128xf32, #tpu.memory_space<vmem>>, vector<1x128x128xf32>
    %3 = vector.shape_cast %2 : vector<1x128x128xf32> to vector<128x128xf32>
    %4 = vector.extract_strided_slice %3 {offsets = [0, 0], sizes = [24, 128], strides = [1, 1]} : vector<128x128xf32> to vector<24x128xf32>
    %cst = arith.constant dense<0.000000e+00> : vector<8x128xf32>
    %5 = tpu.matmul %0, %4, %cst {dimension_numbers = #tpu.dot_dimension_numbers<[1], [0], [0], [1], [0, 0, 1, 1], [], []>} : vector<8x24xf32>, vector<24x128xf32>, vector<8x128xf32> -> vector<8x128xf32>
    %6 = vector.extract_strided_slice %1 {offsets = [0, 0], sizes = [1, 128], strides = [1, 1]} : vector<8x128xf32> to vector<1x128xf32>
    %7 = vector.broadcast %6 : vector<1x128xf32> to vector<8x128xf32>
    %8 = arith.addf %5, %7 : vector<8x128xf32>
    %cst_6 = arith.constant 0.000000e+00 : f32
    %9 = vector.broadcast %cst_6 : f32 to vector<8x128xf32>
    %10 = arith.maximumf %8, %9 : vector<8x128xf32>
    %c1 = arith.constant 1 : index
    %c0_7 = arith.constant 0 : index
    %c0_8 = arith.constant 0 : index
    %11 = vector.load %arg2[%c1, %c0_7, %c0_8] : memref<5x128x128xf32, #tpu.memory_space<vmem>>, vector<1x128x128xf32>
    %12 = vector.shape_cast %11 : vector<1x128x128xf32> to vector<128x128xf32>
    %cst_9 = arith.constant dense<0.000000e+00> : vector<8x128xf32>
    %13 = tpu.matmul %10, %12, %cst_9 {dimension_numbers = #tpu.dot_dimension_numbers<[1], [0], [0], [1], [0, 0, 1, 1], [], []>} : vector<8x128xf32>, vector<128x128xf32>, vector<8x128xf32> -> vector<8x128xf32>
    %14 = vector.extract_strided_slice %1 {offsets = [1, 0], sizes = [1, 128], strides = [1, 1]} : vector<8x128xf32> to vector<1x128xf32>
    %15 = vector.broadcast %14 : vector<1x128xf32> to vector<8x128xf32>
    %16 = arith.addf %13, %15 : vector<8x128xf32>
    %cst_10 = arith.constant 0.000000e+00 : f32
    %17 = vector.broadcast %cst_10 : f32 to vector<8x128xf32>
    %18 = arith.maximumf %16, %17 : vector<8x128xf32>
    %c2 = arith.constant 2 : index
    %c0_11 = arith.constant 0 : index
    %c0_12 = arith.constant 0 : index
    %19 = vector.load %arg2[%c2, %c0_11, %c0_12] : memref<5x128x128xf32, #tpu.memory_space<vmem>>, vector<1x128x128xf32>
    %20 = vector.shape_cast %19 : vector<1x128x128xf32> to vector<128x128xf32>
    %cst_13 = arith.constant dense<0.000000e+00> : vector<8x128xf32>
    %21 = tpu.matmul %18, %20, %cst_13 {dimension_numbers = #tpu.dot_dimension_numbers<[1], [0], [0], [1], [0, 0, 1, 1], [], []>} : vector<8x128xf32>, vector<128x128xf32>, vector<8x128xf32> -> vector<8x128xf32>
    %22 = vector.extract_strided_slice %1 {offsets = [2, 0], sizes = [1, 128], strides = [1, 1]} : vector<8x128xf32> to vector<1x128xf32>
    %23 = vector.broadcast %22 : vector<1x128xf32> to vector<8x128xf32>
    %24 = arith.addf %21, %23 : vector<8x128xf32>
    %cst_14 = arith.constant 0.000000e+00 : f32
    %25 = vector.broadcast %cst_14 : f32 to vector<8x128xf32>
    %26 = arith.maximumf %24, %25 : vector<8x128xf32>
    %c3 = arith.constant 3 : index
    %c0_15 = arith.constant 0 : index
    %c0_16 = arith.constant 0 : index
    %27 = vector.load %arg2[%c3, %c0_15, %c0_16] : memref<5x128x128xf32, #tpu.memory_space<vmem>>, vector<1x128x128xf32>
    %28 = vector.shape_cast %27 : vector<1x128x128xf32> to vector<128x128xf32>
    %cst_17 = arith.constant dense<0.000000e+00> : vector<8x128xf32>
    %29 = tpu.matmul %26, %28, %cst_17 {dimension_numbers = #tpu.dot_dimension_numbers<[1], [0], [0], [1], [0, 0, 1, 1], [], []>} : vector<8x128xf32>, vector<128x128xf32>, vector<8x128xf32> -> vector<8x128xf32>
    %30 = vector.extract_strided_slice %1 {offsets = [3, 0], sizes = [1, 128], strides = [1, 1]} : vector<8x128xf32> to vector<1x128xf32>
    %31 = vector.broadcast %30 : vector<1x128xf32> to vector<8x128xf32>
    %32 = arith.addf %29, %31 : vector<8x128xf32>
    %cst_18 = arith.constant 0.000000e+00 : f32
    %33 = vector.broadcast %cst_18 : f32 to vector<8x128xf32>
    %34 = arith.maximumf %32, %33 : vector<8x128xf32>
    %c4 = arith.constant 4 : index
    %c0_19 = arith.constant 0 : index
    %c0_20 = arith.constant 0 : index
    %35 = vector.load %arg2[%c4, %c0_19, %c0_20] : memref<5x128x128xf32, #tpu.memory_space<vmem>>, vector<1x128x128xf32>
    %36 = vector.shape_cast %35 : vector<1x128x128xf32> to vector<128x128xf32>
    %cst_21 = arith.constant dense<0.000000e+00> : vector<8x128xf32>
    %37 = tpu.matmul %34, %36, %cst_21 {dimension_numbers = #tpu.dot_dimension_numbers<[1], [0], [0], [1], [0, 0, 1, 1], [], []>} : vector<8x128xf32>, vector<128x128xf32>, vector<8x128xf32> -> vector<8x128xf32>
    %38 = vector.extract_strided_slice %1 {offsets = [4, 0], sizes = [1, 128], strides = [1, 1]} : vector<8x128xf32> to vector<1x128xf32>
    %39 = vector.broadcast %38 : vector<1x128xf32> to vector<8x128xf32>
    %40 = arith.addf %37, %39 : vector<8x128xf32>
    %c0_22 = arith.constant 0 : index
    %c0_23 = arith.constant 0 : index
    %41 = vector.load %arg4[%c0_22, %c0_23] : memref<8x128xf32, #tpu.memory_space<vmem>>, vector<8x128xf32>
    tpu.vector_store %arg4[%c0_22, %c0_23], %40 {strides = array<i32>} : memref<8x128xf32, #tpu.memory_space<vmem>>, vector<8x128xf32>,
    return
  }
  func.func @transform_0(%arg0: i32) -> (i32, i32) {
    %c0_i32 = arith.constant 0 : i32
    %c0_i32_0 = arith.constant 0 : i32
    return %arg0, %c0_i32 : i32, i32
  }
  func.func @transform_1(%arg0: i32) -> (i32, i32, i32) {
    %c0_i32 = arith.constant 0 : i32
    %c0_i32_0 = arith.constant 0 : i32
    %c0_i32_1 = arith.constant 0 : i32
    %c0_i32_2 = arith.constant 0 : i32
    return %c0_i32, %c0_i32_0, %c0_i32_1 : i32, i32, i32
  }
  func.func @transform_2(%arg0: i32) -> (i32, i32) {
    %c0_i32 = arith.constant 0 : i32
    %c0_i32_0 = arith.constant 0 : i32
    %c0_i32_1 = arith.constant 0 : i32
    return %c0_i32, %c0_i32_0 : i32, i32
  }
  func.func @transform_3(%arg0: i32) -> (i32, i32) {
    %c0_i32 = arith.constant 0 : i32
    %c0_i32_0 = arith.constant 0 : i32
    return %arg0, %c0_i32 : i32, i32
  }
}

</mosaic_0001>

<llo_original>
// kernel: tpu_custom_call.1
$region0: #{tpu_custom_call.1}
  #allocation0 [shape = 'u32[]', space=smem, size = 0x4, offset = 0x4, fixed_abs, tag = 'smem constant byte address 0x4 - core index']
  #allocation1 [shape = 'u32[72,128]{1,0:T(1,128)}', space=vmem, size = 0x9000, scoped, tag = 'internal scratch']
  %s0 = inlined_call_operand.hbm [shape: f32[2,24], index: 0, kind: input, shape index: {}]
  %s1 = inlined_call_operand.hbm [shape: f32[5,128,128], index: 1, kind: input, shape index: {}]
  %s2 = inlined_call_operand.hbm [shape: f32[8,128], index: 2, kind: input, shape index: {}]
  %s3 = inlined_call_operand.hbm [shape: f32[2,128], index: 3, kind: output, shape index: {}]
  %s4 = sld [smem:[#allocation0]]
  $region34: #{tpu_custom_call.1} parent=0
    _
  %s6 = ssub.s32 1, %s4
  %s7 = scalar_select 0, %s6, %s4
  $region1: #{tpu_custom_call.1} parent=0
    #allocation2 [shape = 'u8[4096]{0}', space=vmem, size = 0x1000, scoped, tag = 'input window, operand 0, single buffered']
    #allocation3 [shape = 's32[1]{0}', space=sflag, size = 0x4, scoped, tag = 'scoped memory for tpu_custom_call.1']
    #allocation4 [shape = 's32[1]{0}', space=sflag, size = 0x4, scoped, tag = 'scoped memory for tpu_custom_call.1']
    #allocation5 [shape = 'u8[327680]{0}', space=vmem, size = 0x50000, scoped, tag = 'input window, operand 1, single buffered']
    #allocation6 [shape = 's32[1]{0}', space=sflag, size = 0x4, scoped, tag = 'scoped memory for tpu_custom_call.1']
    #allocation7 [shape = 'u8[4096]{0}', space=vmem, size = 0x1000, scoped, tag = 'input window, operand 2, single buffered']
    #allocation8 [shape = 'u8[4096]{0}', space=vmem, size = 0x1000, scoped, tag = 'output window, operand 0, single buffered']
    %8 = vsyncpa [#allocation3], 0
    %9 = vsyncpa [#allocation6], 0
    %10 = vsyncpa [#allocation4], 0
    // Predicated region
    $region2: #{tpu_custom_call.1} parent=1 // pred_check
      _
    $region3: #{tpu_custom_call.1} parent=1 // pred_check_branch
      %12 = sbr.rel (0) target = $region5
    $region4: #{tpu_custom_call.1} parent=1 // pred_region
      %14 = vsyncadd [#allocation3], 96
      %s15 = sshll.u32 %s0, 4
      %s16 = int_to_ptr.hbm [resolvable:$true] %s15
      %s17 = sshll.u32 [#allocation2], 4
      %s18 = int_to_ptr.vmem [resolvable:$true] %s17
      %23 = dma.hbm_to_vmem [thread:$0]  %s16, 32, %s18, [#allocation3], 32, 32, 2
    $region5: #{tpu_custom_call.1} parent=1 // pred_fallthru
      _
    // Predicated region
    $region6: #{tpu_custom_call.1} parent=1 // pred_check
      _
    $region7: #{tpu_custom_call.1} parent=1 // pred_check_branch
      %25 = sbr.rel (0) target = $region9
    $region8: #{tpu_custom_call.1} parent=1 // pred_region
      %27 = vsyncadd [#allocation6], 0
      %s28 = sshll.u32 %s1, 4
      %s29 = int_to_ptr.hbm [resolvable:$true] %s28
      %s30 = sshll.u32 [#allocation5], 4
      %s31 = int_to_ptr.vmem [resolvable:$true] %s30
      %36 = dma.hbm_to_vmem [thread:$0]  %s29, 10240, %s31, [#allocation6], 128, 128, 8
    $region9: #{tpu_custom_call.1} parent=1 // pred_fallthru
      _
    // Predicated region
    $region10: #{tpu_custom_call.1} parent=1 // pred_check
      _
    $region11: #{tpu_custom_call.1} parent=1 // pred_check_branch
      %38 = sbr.rel (0) target = $region13
    $region12: #{tpu_custom_call.1} parent=1 // pred_region
      %40 = vsyncadd [#allocation6], 0
      %s42 = sshll.u32 %s2, 4
      %s43 = int_to_ptr.hbm [resolvable:$true] %s42
      %s44 = sshll.u32 [#allocation7], 4
      %s45 = int_to_ptr.vmem [resolvable:$true] %s44
      %47 = dma.hbm_to_vmem [thread:$0]  %s43, 128, %s45, [#allocation6]
    $region13: #{tpu_custom_call.1} parent=1 // pred_fallthru
      _
    // Predicated region
    $region14: #{tpu_custom_call.1} parent=1 // pred_check
      _
    $region15: #{tpu_custom_call.1} parent=1 // pred_check_branch
      %49 = sbr.rel (0) target = $region17
    $region16: #{tpu_custom_call.1} parent=1 // pred_region
      %51 = dma.done [#allocation3], 128
    $region17: #{tpu_custom_call.1} parent=1 // pred_fallthru
      _
    // Predicated region
    $region18: #{tpu_custom_call.1} parent=1 // pred_check
      _
    $region19: #{tpu_custom_call.1} parent=1 // pred_check_branch
      %53 = sbr.rel (0) target = $region21
    $region20: #{tpu_custom_call.1} parent=1 // pred_region
      %55 = dma.done [#allocation6], 10240
    $region21: #{tpu_custom_call.1} parent=1 // pred_fallthru
      _
    // Predicated region
    $region22: #{tpu_custom_call.1} parent=1 // pred_check
      _
    $region23: #{tpu_custom_call.1} parent=1 // pred_check_branch
      %57 = sbr.rel (0) target = $region25
    $region24: #{tpu_custom_call.1} parent=1 // pred_region
      %59 = dma.done [#allocation6], 128
    $region25: #{tpu_custom_call.1} parent=1 // pred_fallthru
      _
    %v60 = vld [vmem:[#allocation2] sm:$0xff]
    %v61 = vld [vmem:[#allocation7] sm:$0xff]
    %v62 = vld [vmem:[#allocation5] sm:$0xff]
    %v63 = vld [vmem:[#allocation5 + $0x8] sm:$0xff]
    %v64 = vld [vmem:[#allocation5 + $0x10] sm:$0xff]
    %v65 = vperm.slane %v61, 0
    %vm66 = vcmask 195584
    %v68 = vsel %vm66, %v60, 0
    %70 = vmatpush.msra.mxu0 0.0
    %71 = vmatpush.msra.mxu0 0.0
    %72 = vmatpush.msra.mxu0 0.0
    %73 = vmatpush.msra.mxu0 0.0
    %74 = vmatpush.msra.mxu0 0.0
    %75 = vmatpush.msra.mxu0 0.0
    %76 = vmatpush.msra.mxu0 0.0
    %77 = vmatpush.msra.mxu0 0.0
    %78 = vmatpush.msra.mxu0 0.0
    %79 = vmatpush.msra.mxu0 0.0
    %80 = vmatpush.msra.mxu0 0.0
    %81 = vmatpush.msra.mxu0 0.0
    %82 = vmatpush.msra.mxu0 0.0
    %83 = vmatpush.msra.mxu0 %v64
    %84 = vmatpush.msra.mxu0 %v63
    %85 = vmatpush.msra.mxu0 %v62
    %86 = vmatmul.f32.gmra.mxu0 %v68
    %v87 = vpop.f32.mrf.mxu0
    %v88 = vadd.f32 %v65, %v87
    %89 = vdwg.mxu0
    %v90 = vmax.f32 %v88, 0.0
    %s91 = scalar_lea.vmem [#allocation5], 128
    %v92 = vld [vmem:[%s91] sm:$0xff]
    %v93 = vld [vmem:[%s91 + $0x8] sm:$0xff]
    %v94 = vld [vmem:[%s91 + $0x10] sm:$0xff]
    %v95 = vld [vmem:[%s91 + $0x18] sm:$0xff]
    %v96 = vld [vmem:[%s91 + $0x20] sm:$0xff]
    %v97 = vld [vmem:[%s91 + $0x28] sm:$0xff]
    %v98 = vld [vmem:[%s91 + $0x30] sm:$0xff]
    %v99 = vld [vmem:[%s91 + $0x38] sm:$0xff]
    %v100 = vld [vmem:[%s91 + $0x40] sm:$0xff]
    %v101 = vld [vmem:[%s91 + $0x48] sm:$0xff]
    %v102 = vld [vmem:[%s91 + $0x50] sm:$0xff]
    %v103 = vld [vmem:[%s91 + $0x58] sm:$0xff]
    %v104 = vld [vmem:[%s91 + $0x60] sm:$0xff]
    %v105 = vld [vmem:[%s91 + $0x68] sm:$0xff]
    %v106 = vld [vmem:[%s91 + $0x70] sm:$0xff]
    %v107 = vld [vmem:[%s91 + $0x78] sm:$0xff]
    %v108 = vperm.slane %v61, 1
    %109 = vmatpush.msra.mxu0 %v107
    %110 = vmatpush.msra.mxu0 %v106
    %111 = vmatpush.msra.mxu0 %v105
    %112 = vmatpush.msra.mxu0 %v104
    %113 = vmatpush.msra.mxu0 %v103
    %114 = vmatpush.msra.mxu0 %v102
    %115 = vmatpush.msra.mxu0 %v101
    %116 = vmatpush.msra.mxu0 %v100
    %117 = vmatpush.msra.mxu0 %v99
    %118 = vmatpush.msra.mxu0 %v98
    %119 = vmatpush.msra.mxu0 %v97
    %120 = vmatpush.msra.mxu0 %v96
    %121 = vmatpush.msra.mxu0 %v95
    %122 = vmatpush.msra.mxu0 %v94
    %123 = vmatpush.msra.mxu0 %v93
    %124 = vmatpush.msra.mxu0 %v92
    %125 = vmatmul.f32.gmra.mxu0 %v90
    %v126 = vpop.f32.mrf.mxu0
    %v127 = vadd.f32 %v108, %v126
    %128 = vdwg.mxu0
    %v129 = vmax.f32 %v127, 0.0
    %s130 = scalar_lea.vmem [#allocation5], 256
    %v131 = vld [vmem:[%s130] sm:$0xff]
    %v132 = vld [vmem:[%s130 + $0x8] sm:$0xff]
    %v133 = vld [vmem:[%s130 + $0x10] sm:$0xff]
    %v134 = vld [vmem:[%s130 + $0x18] sm:$0xff]
    %v135 = vld [vmem:[%s130 + $0x20] sm:$0xff]
    %v136 = vld [vmem:[%s130 + $0x28] sm:$0xff]
    %v137 = vld [vmem:[%s130 + $0x30] sm:$0xff]
    %v138 = vld [vmem:[%s130 + $0x38] sm:$0xff]
    %v139 = vld [vmem:[%s130 + $0x40] sm:$0xff]
    %v140 = vld [vmem:[%s130 + $0x48] sm:$0xff]
    %v141 = vld [vmem:[%s130 + $0x50] sm:$0xff]
    %v142 = vld [vmem:[%s130 + $0x58] sm:$0xff]
    %v143 = vld [vmem:[%s130 + $0x60] sm:$0xff]
    %v144 = vld [vmem:[%s130 + $0x68] sm:$0xff]
    %v145 = vld [vmem:[%s130 + $0x70] sm:$0xff]
    %v146 = vld [vmem:[%s130 + $0x78] sm:$0xff]
    %v147 = vperm.slane %v61, 2
    %148 = vmatpush.msra.mxu0 %v146
    %149 = vmatpush.msra.mxu0 %v145
    %150 = vmatpush.msra.mxu0 %v144
    %151 = vmatpush.msra.mxu0 %v143
    %152 = vmatpush.msra.mxu0 %v142
    %153 = vmatpush.msra.mxu0 %v141
    %154 = vmatpush.msra.mxu0 %v140
    %155 = vmatpush.msra.mxu0 %v139
    %156 = vmatpush.msra.mxu0 %v138
    %157 = vmatpush.msra.mxu0 %v137
    %158 = vmatpush.msra.mxu0 %v136
    %159 = vmatpush.msra.mxu0 %v135
    %160 = vmatpush.msra.mxu0 %v134
    %161 = vmatpush.msra.mxu0 %v133
    %162 = vmatpush.msra.mxu0 %v132
    %163 = vmatpush.msra.mxu0 %v131
    %164 = vmatmul.f32.gmra.mxu0 %v129
    %v165 = vpop.f32.mrf.mxu0
    %v166 = vadd.f32 %v147, %v165
    %167 = vdwg.mxu0
    %v168 = vmax.f32 %v166, 0.0
    %s169 = scalar_lea.vmem [#allocation5], 384
    %v170 = vld [vmem:[%s169] sm:$0xff]
    %v171 = vld [vmem:[%s169 + $0x8] sm:$0xff]
    %v172 = vld [vmem:[%s169 + $0x10] sm:$0xff]
    %v173 = vld [vmem:[%s169 + $0x18] sm:$0xff]
    %v174 = vld [vmem:[%s169 + $0x20] sm:$0xff]
    %v175 = vld [vmem:[%s169 + $0x28] sm:$0xff]
    %v176 = vld [vmem:[%s169 + $0x30] sm:$0xff]
    %v177 = vld [vmem:[%s169 + $0x38] sm:$0xff]
    %v178 = vld [vmem:[%s169 + $0x40] sm:$0xff]
    %v179 = vld [vmem:[%s169 + $0x48] sm:$0xff]
    %v180 = vld [vmem:[%s169 + $0x50] sm:$0xff]
    %v181 = vld [vmem:[%s169 + $0x58] sm:$0xff]
    %v182 = vld [vmem:[%s169 + $0x60] sm:$0xff]
    %v183 = vld [vmem:[%s169 + $0x68] sm:$0xff]
    %v184 = vld [vmem:[%s169 + $0x70] sm:$0xff]
    %v185 = vld [vmem:[%s169 + $0x78] sm:$0xff]
    %v186 = vperm.slane %v61, 3
    %187 = vmatpush.msra.mxu0 %v185
    %188 = vmatpush.msra.mxu0 %v184
    %189 = vmatpush.msra.mxu0 %v183
    %190 = vmatpush.msra.mxu0 %v182
    %191 = vmatpush.msra.mxu0 %v181
    %192 = vmatpush.msra.mxu0 %v180
    %193 = vmatpush.msra.mxu0 %v179
    %194 = vmatpush.msra.mxu0 %v178
    %195 = vmatpush.msra.mxu0 %v177
    %196 = vmatpush.msra.mxu0 %v176
    %197 = vmatpush.msra.mxu0 %v175
    %198 = vmatpush.msra.mxu0 %v174
    %199 = vmatpush.msra.mxu0 %v173
    %200 = vmatpush.msra.mxu0 %v172
    %201 = vmatpush.msra.mxu0 %v171
    %202 = vmatpush.msra.mxu0 %v170
    %203 = vmatmul.f32.gmra.mxu0 %v168
    %v204 = vpop.f32.mrf.mxu0
    %v205 = vadd.f32 %v186, %v204
    %206 = vdwg.mxu0
    %v207 = vmax.f32 %v205, 0.0
    %s208 = scalar_lea.vmem [#allocation5], 512
    %v209 = vld [vmem:[%s208] sm:$0xff]
    %v210 = vld [vmem:[%s208 + $0x8] sm:$0xff]
    %v211 = vld [vmem:[%s208 + $0x10] sm:$0xff]
    %v212 = vld [vmem:[%s208 + $0x18] sm:$0xff]
    %v213 = vld [vmem:[%s208 + $0x20] sm:$0xff]
    %v214 = vld [vmem:[%s208 + $0x28] sm:$0xff]
    %v215 = vld [vmem:[%s208 + $0x30] sm:$0xff]
    %v216 = vld [vmem:[%s208 + $0x38] sm:$0xff]
    %v217 = vld [vmem:[%s208 + $0x40] sm:$0xff]
    %v218 = vld [vmem:[%s208 + $0x48] sm:$0xff]
    %v219 = vld [vmem:[%s208 + $0x50] sm:$0xff]
    %v220 = vld [vmem:[%s208 + $0x58] sm:$0xff]
    %v221 = vld [vmem:[%s208 + $0x60] sm:$0xff]
    %v222 = vld [vmem:[%s208 + $0x68] sm:$0xff]
    %v223 = vld [vmem:[%s208 + $0x70] sm:$0xff]
    %v224 = vld [vmem:[%s208 + $0x78] sm:$0xff]
    %v225 = vperm.slane %v61, 4
    %226 = vmatpush.msra.mxu0 %v224
    %227 = vmatpush.msra.mxu0 %v223
    %228 = vmatpush.msra.mxu0 %v222
    %229 = vmatpush.msra.mxu0 %v221
    %230 = vmatpush.msra.mxu0 %v220
    %231 = vmatpush.msra.mxu0 %v219
    %232 = vmatpush.msra.mxu0 %v218
    %233 = vmatpush.msra.mxu0 %v217
    %234 = vmatpush.msra.mxu0 %v216
    %235 = vmatpush.msra.mxu0 %v215
    %236 = vmatpush.msra.mxu0 %v214
    %237 = vmatpush.msra.mxu0 %v213
    %238 = vmatpush.msra.mxu0 %v212
    %239 = vmatpush.msra.mxu0 %v211
    %240 = vmatpush.msra.mxu0 %v210
    %241 = vmatpush.msra.mxu0 %v209
    %242 = vmatmul.f32.gmra.mxu0 %v207
    %v243 = vpop.f32.mrf.mxu0
    %v244 = vadd.f32 %v225, %v243
    %245 = vdwg.mxu0
    %246 = vst [vmem:[#allocation8] sm:$0xff] %v244
    // Predicated region
    $region26: #{tpu_custom_call.1} parent=1 // pred_check
      _
    $region27: #{tpu_custom_call.1} parent=1 // pred_check_branch
      %248 = sbr.rel (0) target = $region29
    $region28: #{tpu_custom_call.1} parent=1 // pred_region
      %250 = vsyncadd [#allocation4], 96
      %s251 = sshll.u32 [#allocation8], 4
      %s252 = int_to_ptr.vmem [resolvable:$true] %s251
      %s253 = sshll.u32 %s3, 4
      %s254 = int_to_ptr.hbm [resolvable:$true] %s253
      %259 = dma.vmem_to_hbm [thread:$0]  %s252, 32, %s254, [#allocation4], 32, 32, 2
    $region29: #{tpu_custom_call.1} parent=1 // pred_fallthru
      _
    // Predicated region
    $region30: #{tpu_custom_call.1} parent=1 // pred_check
      _
    $region31: #{tpu_custom_call.1} parent=1 // pred_check_branch
      %261 = sbr.rel (0) target = $region33
    $region32: #{tpu_custom_call.1} parent=1 // pred_region
      %263 = dma.done [#allocation4], 128
    $region33: #{tpu_custom_call.1} parent=1 // pred_fallthru
      _
    %264 = vsyncpa [#allocation3], 1
    %265 = vsyncpa [#allocation6], 1
    %266 = vsyncpa [#allocation4], 1

</llo_original>
